<compile_context>
chip_gen: v5e
topology: v5e:2x2
jax: 0.10.0
libtpu: 0.0.40
codegen_flags: <defaults>
</compile_context>

<pallas_src>
import math

import jax
import jax.numpy as jnp
from jax.experimental import pallas as pl
from jax.experimental.pallas import tpu as pltpu


def _round_up(x, m):
    return ((x + m - 1) // m) * m


def _cdiv(a, b):
    return -(-a // b)


def _matmul_kernel_inplace(a_ref, b_ref, o_ref):
    """fp32-output variant: accumulate directly into the VMEM-resident output
    block (output BlockSpec is constant across the arbitrary K axis)."""
    k = pl.program_id(2)
    p = jnp.dot(a_ref[...], b_ref[...], preferred_element_type=jnp.float32)

    @pl.when(k == 0)
    def _():
        o_ref[...] = p

    @pl.when(k > 0)
    def _():
        o_ref[...] += p


def _matmul_kernel_acc(a_ref, b_ref, o_ref, acc_ref):
    """General variant: fp32 scratch accumulator, cast + store on last K step."""
    k = pl.program_id(2)
    p = jnp.dot(a_ref[...], b_ref[...], preferred_element_type=jnp.float32)

    @pl.when(k == 0)
    def _():
        acc_ref[...] = p

    @pl.when(k > 0)
    def _():
        acc_ref[...] += p

    @pl.when(k == pl.num_programs(2) - 1)
    def _():
        o_ref[...] = acc_ref[...].astype(o_ref.dtype)


def matmul_pallas(x1, x2, *, tm=512, tn=512, tk=512, vmem_limit_bytes=None):
    """Computes x1 @ x2 with x1: (..., K) and x2: (K, N)."""
    *lead, K = x1.shape
    K2, N = x2.shape
    assert K == K2, f"inner dims must match, got {K} and {K2}"
    out_dtype = jnp.result_type(x1.dtype, x2.dtype)

    M = math.prod(lead) if lead else 1
    a = x1.reshape(M, K)
    b = x2

    isa = jnp.dtype(x1.dtype).itemsize
    isb = jnp.dtype(x2.dtype).itemsize
    iso = jnp.dtype(out_dtype).itemsize

    # ---- VMEM budget (v7x has 64 MiB, v5e/v6e 128 MiB) ----------------------
    try:
        info = pltpu.get_tpu_info()
        vmem_cap = int(getattr(info, "vmem_capacity_bytes", 64 * 1024 * 1024))
    except Exception:
        vmem_cap = 64 * 1024 * 1024  # conservative (v7x) fallback
    budget = int(vmem_cap * 0.7)

    # ---- tile selection ------------------------------------------------------
    # Lane dims (tk of A, tn of B/out) must be 128-multiples unless they span
    # the full array dim; sublane dims (tm; tk of B) only need 8-multiples.
    tm = _round_up(tm, 8)
    tn = _round_up(tn, 128)
    tk = _round_up(tk, 128)

    m_aligned = _round_up(M, 8)
    n_aligned = _round_up(N, 128)
    tm_eff = min(tm, m_aligned)
    tn_eff = min(tn, n_aligned)

    use_scratch = out_dtype != jnp.float32

    def footprint(tm_, tn_, tk_):
        fp = 2 * tm_ * tk_ * isa + 2 * tk_ * tn_ * isb + 2 * tm_ * tn_ * iso
        if use_scratch:
            fp += tm_ * tn_ * 4
        return fp

    # Prefer the no-K-padding path (tk == K, single K step) when it fits
    # comfortably in VMEM: avoids an extra HBM pad pass over A/B and avoids
    # MXU work on zero-padded K columns.
    full_k_ok = footprint(tm_eff, tn_eff, K) <= budget // 2
    if full_k_ok:
        tk_eff = K
        Kp = K
    else:
        tk_eff = min(tk, _round_up(K, 128))
        Kp = _round_up(K, tk_eff)

    # Shrink tiles until the double-buffered footprint fits the budget.
    while footprint(tm_eff, tn_eff, tk_eff) > budget:
        if not full_k_ok and tk_eff > 128:
            tk_eff = max(128, _round_up(tk_eff // 2, 128))
            Kp = _round_up(K, tk_eff)
        elif tm_eff > 128:
            tm_eff = max(128, _round_up(tm_eff // 2, 8))
        elif tn_eff > 128:
            tn_eff = max(128, _round_up(tn_eff // 2, 128))
        else:
            break

    # Megacore (v7x: 2 TensorCores): make sure the "parallel" M/N axes have at
    # least 2 blocks when the problem is big enough to split.
    if (_cdiv(m_aligned, tm_eff) == 1 and _cdiv(n_aligned, tn_eff) == 1
            and m_aligned >= 16):
        tm_eff = _round_up(_cdiv(m_aligned, 2), 8)

    # ---- padding (zero-fill; only where tiles require it) -------------------
    # TODO(synk): for very large ragged M/N, masked edge tiles would avoid the
    # extra pad/slice HBM passes entirely.
    Mp = _round_up(M, tm_eff)
    Np = _round_up(N, tn_eff)

    a_p = a if (Mp, Kp) == (M, K) else jnp.pad(a, ((0, Mp - M), (0, Kp - K)))
    b_p = b if (Kp, Np) == (K, N) else jnp.pad(b, ((0, Kp - K), (0, Np - N)))

    grid = (Mp // tm_eff, Np // tn_eff, Kp // tk_eff)
    grid_m, grid_n, _ = grid

    # ---- VMEM limit ----------------------------------------------------------
    if vmem_limit_bytes is None:
        need = footprint(tm_eff, tn_eff, tk_eff) + (8 << 20)
        vmem_limit_bytes = min(int(vmem_cap * 0.9), max(64 << 20, need))

    # ---- cost estimate: reflect actual HBM traffic (operand re-reads) -------
    cost = pl.CostEstimate(
        flops=2 * Mp * Kp * Np,
        transcendentals=0,
        bytes_accessed=(Mp * Kp * isa * grid_n
                        + Kp * Np * isb * grid_m
                        + Mp * Np * iso),
    )

    kernel = _matmul_kernel_acc if use_scratch else _matmul_kernel_inplace
    scratch_shapes = ([pltpu.VMEM((tm_eff, tn_eff), jnp.float32)]
                      if use_scratch else [])

    out = pl.pallas_call(
        kernel,
        out_shape=jax.ShapeDtypeStruct((Mp, Np), out_dtype),
        grid_spec=pltpu.PrefetchScalarGridSpec(
            num_scalar_prefetch=0,
            grid=grid,
            in_specs=[
                pl.BlockSpec((tm_eff, tk_eff), lambda i, j, k: (i, k)),
                pl.BlockSpec((tk_eff, tn_eff), lambda i, j, k: (k, j)),
            ],
            out_specs=pl.BlockSpec((tm_eff, tn_eff), lambda i, j, k: (i, j)),
            scratch_shapes=scratch_shapes,
        ),
        compiler_params=pltpu.CompilerParams(
            dimension_semantics=("parallel", "parallel", "arbitrary"),
            vmem_limit_bytes=int(vmem_limit_bytes),
        ),
        cost_estimate=cost,
    )(a_p, b_p)

    if (Mp, Np) != (M, N):
        out = out[:M, :N]
    return out.reshape(*lead, N) if lead else out.reshape(N)


if __name__ == "__main__":
    key = jax.random.PRNGKey(0)
    k1, k2 = jax.random.split(key)

    # Small shapes consistent with the module (x1 @ x2 with a leading batch
    # dim).  Non-multiples of 128 exercise the tile clamping, the no-K-padding
    # (tk == K) path, the N padding path, and the megacore M split.
    x1 = jax.random.normal(k1, (2, 192, 160), jnp.float32)
    x2 = jax.random.normal(k2, (160, 288), jnp.float32)

    y = matmul_pallas(x1, x2)
    jax.block_until_ready(y)

    # Pure-JAX reference (same math as the PyTorch forward).
    y_ref = jnp.matmul(x1, x2, precision=jax.lax.Precision.HIGHEST)
    assert y.shape == y_ref.shape, (y.shape, y_ref.shape)
    assert jnp.allclose(y, y_ref, atol=1e-3, rtol=1e-3), "mismatch vs reference"

    print("KERNEL_OK")
</pallas_src>

<mosaic_0001>
module attributes {stable_mosaic.version = 11 : i64} {
  func.func @_matmul_kernel_inplace(%arg0: i32, %arg1: i32, %arg2: i32, %arg3: memref<192x160xf32, #tpu.memory_space<vmem>>, %arg4: memref<160x384xf32, #tpu.memory_space<vmem>>, %arg5: memref<192x384xf32, #tpu.memory_space<vmem>>) attributes {dimension_semantics = [#tpu.dimension_semantics<parallel>, #tpu.dimension_semantics<parallel>, #tpu.dimension_semantics<arbitrary>], iteration_bounds = array<i64: 2, 1, 1>, scalar_prefetch = 0 : i64, scratch_operands = 0 : i64, tpu.core_type = #tpu.core_type<tc>, window_params = [{transform_indices = @transform_0, window_bounds = array<i64: 192, 160>}, {transform_indices = @transform_1, window_bounds = array<i64: 160, 384>}, {transform_indices = @transform_2, window_bounds = array<i64: 192, 384>}]} {
    %c0 = arith.constant 0 : index
    %c0_0 = arith.constant 0 : index
    %0 = vector.load %arg3[%c0, %c0_0] : memref<192x160xf32, #tpu.memory_space<vmem>>, vector<192x160xf32>
    %c0_1 = arith.constant 0 : index
    %c0_2 = arith.constant 0 : index
    %1 = vector.load %arg4[%c0_1, %c0_2] : memref<160x384xf32, #tpu.memory_space<vmem>>, vector<160x384xf32>
    %cst = arith.constant dense<0.000000e+00> : vector<192x384xf32>
    %2 = tpu.matmul %0, %1, %cst {dimension_numbers = #tpu.dot_dimension_numbers<[1], [0], [0], [1], [0, 0, 1, 1], [], []>} : vector<192x160xf32>, vector<160x384xf32>, vector<192x384xf32> -> vector<192x384xf32>
    %c0_i32 = arith.constant 0 : i32
    %3 = arith.cmpi eq, %arg2, %c0_i32 : i32
    %4 = arith.extui %3 : i1 to i32
    %c0_i32_3 = arith.constant 0 : i32
    %5 = arith.cmpi ne, %4, %c0_i32_3 : i32
    scf.if %5 {
      %c0_6 = arith.constant 0 : index
      %c0_7 = arith.constant 0 : index
      %9 = vector.load %arg5[%c0_6, %c0_7] : memref<192x384xf32, #tpu.memory_space<vmem>>, vector<192x384xf32>
      tpu.vector_store %arg5[%c0_6, %c0_7], %2 {strides = array<i32>} : memref<192x384xf32, #tpu.memory_space<vmem>>, vector<192x384xf32>,
    } else {
    }
    %c0_i32_4 = arith.constant 0 : i32
    %6 = arith.cmpi sgt, %arg2, %c0_i32_4 : i32
    %7 = arith.extui %6 : i1 to i32
    %c0_i32_5 = arith.constant 0 : i32
    %8 = arith.cmpi ne, %7, %c0_i32_5 : i32
    scf.if %8 {
      %c0_6 = arith.constant 0 : index
      %c0_7 = arith.constant 0 : index
      %9 = vector.load %arg5[%c0_6, %c0_7] : memref<192x384xf32, #tpu.memory_space<vmem>>, vector<192x384xf32>
      %10 = arith.addf %9, %2 : vector<192x384xf32>
      %c0_8 = arith.constant 0 : index
      %c0_9 = arith.constant 0 : index
      %11 = vector.load %arg5[%c0_8, %c0_9] : memref<192x384xf32, #tpu.memory_space<vmem>>, vector<192x384xf32>
      tpu.vector_store %arg5[%c0_8, %c0_9], %10 {strides = array<i32>} : memref<192x384xf32, #tpu.memory_space<vmem>>, vector<192x384xf32>,
    } else {
    }
    return
  }
  func.func @transform_0(%arg0: i32, %arg1: i32, %arg2: i32) -> (i32, i32) {
    %c0_i32 = arith.constant 0 : i32
    return %arg0, %arg2 : i32, i32
  }
  func.func @transform_1(%arg0: i32, %arg1: i32, %arg2: i32) -> (i32, i32) {
    %c0_i32 = arith.constant 0 : i32
    return %arg2, %arg1 : i32, i32
  }
  func.func @transform_2(%arg0: i32, %arg1: i32, %arg2: i32) -> (i32, i32) {
    %c0_i32 = arith.constant 0 : i32
    return %arg0, %arg1 : i32, i32
  }
}

</mosaic_0001>

<llo_original>
// kernel: tpu_custom_call.1
$region0: #{tpu_custom_call.1}
  #allocation0 [shape = 'u32[]', space=smem, size = 0x4, offset = 0x4, fixed_abs, tag = 'smem constant byte address 0x4 - core index']
  #allocation1 [shape = 'u32[72,128]{1,0:T(1,128)}', space=vmem, size = 0x9000, scoped, tag = 'internal scratch']
  %s0 = inlined_call_operand.vmem [shape: f32[384,160], index: 0, kind: input, shape index: {}]
  %s1 = inlined_call_operand.vmem [shape: f32[160,384], index: 1, kind: input, shape index: {}]
  %s2 = inlined_call_operand.hbm [shape: f32[384,384], index: 2, kind: output, shape index: {}]
  %s3 = sld [smem:[#allocation0]]
  $region49: #{tpu_custom_call.1} parent=0
    _
  %s5 = ssub.s32 1, %s3
  %s6 = scalar_select 0, %s5, %s3
  $region1: #{tpu_custom_call.1} parent=0
    #allocation2 [shape = 'u8[589824]{0}', space=vmem, size = 0x90000, scoped, tag = 'output window, operand 0']
    #allocation3 [shape = 's32[2]{0}', space=sflag, size = 0x8, scoped, tag = 'scoped memory for tpu_custom_call.1']
    %7 = vsyncpa [#allocation3], 0
    %s8 = scalar_lea.sflag [#allocation3], 1
    %9 = vsyncpa %s8, 0
    loop: start=0, step=1, limit=4
    $region2: #{tpu_custom_call.1} parent=1 // loop_pre_header
      _
    $region3: #{tpu_custom_call.1} parent=1 // loop_header
      %s11 = sphi 0, %s15
      %p12 = scmp.ge.s32.totalorder %s11, 4
      %s18 = sphi 0, %s37
      %s19 = sphi 0, %s33
      %s20 = sphi 0, %s29
      %s21 = sphi 0, %s18
      %s22 = sphi 0, %s19
      %s23 = sphi 0, %s20
      %s24 = sphi 0, %s21
      %s25 = sphi 0, %s22
      %s26 = sphi 0, %s23
      %s42 = sphi 0, %s44
      %s45 = sphi 0, %s42
      %s46 = sphi 0, %s45
      %s62 = sphi 0, %s46
      %s70 = sphi 0, %s72
      %s73 = sphi 0, %s70
      %s74 = sphi 0, %s73
      %s90 = sphi 0, %s74
      %s98 = sphi 0, %s100
      %s101 = sphi 0, %s98
      %s102 = sphi 0, %s101
      %s118 = sphi 0, %s102
    $region4: #{tpu_custom_call.1} parent=1 // loop_header_branch
      %14 = sbr.rel (%p12) target = $region8
    $region5: #{tpu_custom_call.1} parent=1 // loop_body
      %s16 = ssub.s32 %s11, 1
      %s17 = ssub.s32 %s11, 2
      %s27 = sadd.s32 1, %s20
      %p28 = scmp.ge.s32.totalorder %s27, 1
      %s29 = scalar_select %p28, 0, %s27
      %s30 = sadd.s32 1, %s19
      %s31 = scalar_select %p28, %s30, %s19
      %p32 = scmp.ge.s32.totalorder %s31, 1
      %s33 = scalar_select %p32, 0, %s31
      %s34 = sadd.s32 1, %s18
      %s35 = scalar_select %p32, %s34, %s18
      %p36 = scmp.ge.s32.totalorder %s35, 2
      %s37 = scalar_select %p36, 0, %s35
      %s38 = ssub.s32 %s18, %s37
      %s39 = ssub.s32 %s20, %s29
      %s40 = sor.u32 %s38, %s39
      %p41 = scmp.eq.s32.totalorder %s40, 0
      %s43 = sadd.s32 %s42, 1
      %s44 = scalar_select %p41, %s42, %s43
      %p47 = pneg %p41
      %p48 = scmp.eq.s32.totalorder %s11, 1
      %p49 = por %p47, %p48
      %p50 = scmp.ne.s32.totalorder %s42, %s45
      %p51 = scmp.eq.s32.totalorder %s11, 0
      %p52 = por %p50, %p51
      %p53 = scmp.ne.s32.totalorder %s42, %s45
      %p54 = scmp.eq.s32.totalorder %s16, 1
      %p55 = por %p53, %p54
      %p56 = scmp.ne.s32.totalorder %s45, %s46
      %p57 = scmp.eq.s32.totalorder %s16, 0
      %p58 = por %p56, %p57
      %p59 = scmp.ne.s32.totalorder %s45, %s46
      %p60 = scmp.eq.s32.totalorder %s17, 1
      %p61 = por %p59, %p60
      %p63 = scmp.ne.s32.totalorder %s46, %s62
      %p64 = scmp.eq.s32.totalorder %s17, 0
      %p65 = por %p63, %p64
      %s66 = ssub.s32 %s20, %s29
      %s67 = ssub.s32 %s19, %s33
      %s68 = sor.u32 %s66, %s67
      %p69 = scmp.eq.s32.totalorder %s68, 0
      %s71 = sadd.s32 %s70, 1
      %s72 = scalar_select %p69, %s70, %s71
      %p75 = pneg %p69
      %p76 = scmp.eq.s32.totalorder %s11, 1
      %p77 = por %p75, %p76
      %p78 = scmp.ne.s32.totalorder %s70, %s73
      %p79 = scmp.eq.s32.totalorder %s11, 0
      %p80 = por %p78, %p79
      %p81 = scmp.ne.s32.totalorder %s70, %s73
      %p82 = scmp.eq.s32.totalorder %s16, 1
      %p83 = por %p81, %p82
      %p84 = scmp.ne.s32.totalorder %s73, %s74
      %p85 = scmp.eq.s32.totalorder %s16, 0
      %p86 = por %p84, %p85
      %p87 = scmp.ne.s32.totalorder %s73, %s74
      %p88 = scmp.eq.s32.totalorder %s17, 1
      %p89 = por %p87, %p88
      %p91 = scmp.ne.s32.totalorder %s74, %s90
      %p92 = scmp.eq.s32.totalorder %s17, 0
      %p93 = por %p91, %p92
      %s94 = ssub.s32 %s18, %s37
      %s95 = ssub.s32 %s19, %s33
      %s96 = sor.u32 %s94, %s95
      %p97 = scmp.eq.s32.totalorder %s96, 0
      %s99 = sadd.s32 %s98, 1
      %s100 = scalar_select %p97, %s98, %s99
      %p103 = pneg %p97
      %p104 = scmp.eq.s32.totalorder %s11, 1
      %p105 = por %p103, %p104
      %p106 = scmp.ne.s32.totalorder %s98, %s101
      %p107 = scmp.eq.s32.totalorder %s11, 0
      %p108 = por %p106, %p107
      %p109 = scmp.ne.s32.totalorder %s98, %s101
      %p110 = scmp.eq.s32.totalorder %s16, 1
      %p111 = por %p109, %p110
      %p112 = scmp.ne.s32.totalorder %s101, %s102
      %p113 = scmp.eq.s32.totalorder %s16, 0
      %p114 = por %p112, %p113
      %p115 = scmp.ne.s32.totalorder %s101, %s102
      %p116 = scmp.eq.s32.totalorder %s17, 1
      %p117 = por %p115, %p116
      %p119 = scmp.ne.s32.totalorder %s102, %s118
      %p120 = scmp.eq.s32.totalorder %s17, 0
      %p121 = por %p119, %p120
      %p122 = scmp.le.s32.totalorder 1, %s11
      %p123 = scmp.lt.s32.totalorder %s11, 3
      %p124 = pnand %p122, %p123
      %p125 = pneg %p124
      // Predicated region
      $region9: #{tpu_custom_call.1} parent=5 // pred_check
        _
      $region10: #{tpu_custom_call.1} parent=5 // pred_check_branch
        %127 = sbr.rel (%p124) target = $region12
      $region11: #{tpu_custom_call.1} parent=5 // pred_region
        %s128 = ssub.s32 %s11, 1
        // Predicated region
        $region13: #{tpu_custom_call.1} parent=11 // pred_check
          %p129 = pneg %p86
        $region14: #{tpu_custom_call.1} parent=11 // pred_check_branch
          %131 = sbr.rel (%p129) target = $region16
        $region15: #{tpu_custom_call.1} parent=11 // pred_region
          %s132 = smul.u32 20, %s23
          %s133 = smul.u32 3, %s22
          %p134 = scmp.lt.s32.totalorder %s132, 19
          %s135 = scalar_select %p134, %s132, 19
          %p136 = scmp.lt.s32.totalorder %s133, 2
          %s137 = scalar_select %p136, %s133, 2
          %s138 = smul.addr %s135, 3
          %s139 = sadd.s32 %s137, %s138
          %s140 = smul.addr %s139, 8
          %s141 = scalar_lea.vmem %s1, %s140
          %s142 = smul.u32 20, %s23
          %s143 = smul.u32 3, %s22
        $region16: #{tpu_custom_call.1} parent=11 // pred_fallthru
          _
      $region12: #{tpu_custom_call.1} parent=5 // pred_fallthru
        _
      %p144 = scmp.lt.s32.totalorder %s11, 2
      // Predicated region
      $region17: #{tpu_custom_call.1} parent=5 // pred_check
        %p145 = pneg %p144
      $region18: #{tpu_custom_call.1} parent=5 // pred_check_branch
        %147 = sbr.rel (%p145) target = $region20
      $region19: #{tpu_custom_call.1} parent=5 // pred_region
        // Predicated region
        $region21: #{tpu_custom_call.1} parent=19 // pred_check
          %p148 = pneg %p52
        $region22: #{tpu_custom_call.1} parent=19 // pred_check_branch
          %150 = sbr.rel (%p148) target = $region24
        $region23: #{tpu_custom_call.1} parent=19 // pred_region
          %s151 = smul.u32 24, %s18
          %s152 = smul.u32 2, %s20
          %p153 = scmp.lt.s32.totalorder %s151, 47
          %s154 = scalar_select %p153, %s151, 47
          %p155 = scmp.lt.s32.totalorder %s152, 1
          %s156 = scalar_select %p155, %s152, 1
          %s157 = smul.addr %s154, 2
          %s158 = sadd.s32 %s156, %s157
          %s159 = smul.addr %s158, 8
          %s160 = scalar_lea.vmem %s0, %s159
          %s161 = smul.u32 24, %s18
          %s162 = smul.u32 2, %s20
        $region24: #{tpu_custom_call.1} parent=19 // pred_fallthru
          _
      $region20: #{tpu_custom_call.1} parent=5 // pred_fallthru
        _
      %p163 = scmp.le.s32.totalorder 1, %s11
      %p164 = scmp.lt.s32.totalorder %s11, 3
      %p165 = pnand %p163, %p164
      %p166 = pneg %p165
      // Predicated region
      $region25: #{tpu_custom_call.1} parent=5 // pred_check
        _
      $region26: #{tpu_custom_call.1} parent=5 // pred_check_branch
        %168 = sbr.rel (%p165) target = $region28
      $region27: #{tpu_custom_call.1} parent=5 // pred_region
        %s169 = ssub.s32 %s11, 1
        %s170 = smul.u32 24, %s21
        %s171 = smul.u32 2, %s23
        %p172 = scmp.lt.s32.totalorder %s170, 47
        %s173 = scalar_select %p172, %s170, 47
        %p174 = scmp.lt.s32.totalorder %s171, 1
        %s175 = scalar_select %p174, %s171, 1
        %s176 = smul.addr %s173, 2
        %s177 = sadd.s32 %s175, %s176
        %s178 = smul.addr %s177, 8
        %s179 = scalar_lea.vmem %s0, %s178
        %p180 = pneg %p58
        %p181 = pneg %p55
        %s182 = smul.u32 20, %s23
        %s183 = smul.u32 3, %s22
        %p184 = scmp.lt.s32.totalorder %s182, 19
        %s185 = scalar_select %p184, %s182, 19
        %p186 = scmp.lt.s32.totalorder %s183, 2
        %s187 = scalar_select %p186, %s183, 2
        %s188 = smul.addr %s185, 3
        %s189 = sadd.s32 %s187, %s188
        %s190 = smul.addr %s189, 8
        %s191 = scalar_lea.vmem %s1, %s190
        %p192 = pneg %p86
        %p193 = pneg %p83
        %p194 = pneg %p114
        %p195 = pneg %p111
        %s196 = sand.u32 %s101, 1
        %s197 = scalar_lea.sflag [#allocation3], %s196
        %s198 = sand.u32 %s101, 1
        %s199 = smul.addr %s198, 576
        %s200 = scalar_lea.vmem [#allocation2], %s199
        %s201 = smul.u32 24, %s21
        %s202 = smul.u32 2, %s23
        %p203 = scmp.lt.s32.totalorder %s201, 47
        %s204 = scalar_select %p203, %s201, 47
        %p205 = scmp.lt.s32.totalorder %s202, 1
        %s206 = scalar_select %p205, %s202, 1
        %s207 = smul.addr %s204, 2
        %s208 = sadd.s32 %s206, %s207
        %s209 = smul.addr %s208, 8
        %s210 = scalar_lea.vmem %s0, %s209
        %s211 = smul.u32 24, %s21
        %s212 = smul.u32 2, %s23
        %s213 = smul.u32 20, %s23
        %s214 = smul.u32 3, %s22
        %p215 = scmp.lt.s32.totalorder %s213, 19
        %s216 = scalar_select %p215, %s213, 19
        %p217 = scmp.lt.s32.totalorder %s214, 2
        %s218 = scalar_select %p217, %s214, 2
        %s219 = smul.addr %s216, 3
        %s220 = sadd.s32 %s218, %s219
        %s221 = smul.addr %s220, 8
        %s222 = scalar_lea.vmem %s1, %s221
        %s223 = smul.u32 20, %s23
        %s224 = smul.u32 3, %s22
        %s225 = smul.u32 24, %s21
        %s226 = smul.u32 3, %s22
        %v227 = vld [vmem:[%s210] sm:$0xff]
        %v228 = vld [vmem:[%s210 + $0x8] sm:$0xff]
        %v229 = vld [vmem:[%s210 + $0x10] sm:$0xff]
        %v230 = vld [vmem:[%s210 + $0x18] sm:$0xff]
        %v231 = vld [vmem:[%s210 + $0x20] sm:$0xff]
        %v232 = vld [vmem:[%s210 + $0x28] sm:$0xff]
        %v233 = vld [vmem:[%s210 + $0x30] sm:$0xff]
        %v234 = vld [vmem:[%s210 + $0x38] sm:$0xff]
        %v235 = vld [vmem:[%s210 + $0x40] sm:$0xff]
        %v236 = vld [vmem:[%s210 + $0x48] sm:$0xff]
        %v237 = vld [vmem:[%s210 + $0x50] sm:$0xff]
        %v238 = vld [vmem:[%s210 + $0x58] sm:$0xff]
        %v239 = vld [vmem:[%s210 + $0x60] sm:$0xff]
        %v240 = vld [vmem:[%s210 + $0x68] sm:$0xff]
        %v241 = vld [vmem:[%s210 + $0x70] sm:$0xff]
        %v242 = vld [vmem:[%s210 + $0x78] sm:$0xff]
        %v243 = vld [vmem:[%s210 + $0x80] sm:$0xff]
        %v244 = vld [vmem:[%s210 + $0x88] sm:$0xff]
        %v245 = vld [vmem:[%s210 + $0x90] sm:$0xff]
        %v246 = vld [vmem:[%s210 + $0x98] sm:$0xff]
        %v247 = vld [vmem:[%s210 + $0xa0] sm:$0xff]
        %v248 = vld [vmem:[%s210 + $0xa8] sm:$0xff]
        %v249 = vld [vmem:[%s210 + $0xb0] sm:$0xff]
        %v250 = vld [vmem:[%s210 + $0xb8] sm:$0xff]
        %v251 = vld [vmem:[%s210 + $0xc0] sm:$0xff]
        %v252 = vld [vmem:[%s210 + $0xc8] sm:$0xff]
        %v253 = vld [vmem:[%s210 + $0xd0] sm:$0xff]
        %v254 = vld [vmem:[%s210 + $0xd8] sm:$0xff]
        %v255 = vld [vmem:[%s210 + $0xe0] sm:$0xff]
        %v256 = vld [vmem:[%s210 + $0xe8] sm:$0xff]
        %v257 = vld [vmem:[%s210 + $0xf0] sm:$0xff]
        %v258 = vld [vmem:[%s210 + $0xf8] sm:$0xff]
        %v259 = vld [vmem:[%s210 + $0x100] sm:$0xff]
        %v260 = vld [vmem:[%s210 + $0x108] sm:$0xff]
        %v261 = vld [vmem:[%s210 + $0x110] sm:$0xff]
        %v262 = vld [vmem:[%s210 + $0x118] sm:$0xff]
        %v263 = vld [vmem:[%s210 + $0x120] sm:$0xff]
        %v264 = vld [vmem:[%s210 + $0x128] sm:$0xff]
        %v265 = vld [vmem:[%s210 + $0x130] sm:$0xff]
        %v266 = vld [vmem:[%s210 + $0x138] sm:$0xff]
        %v267 = vld [vmem:[%s210 + $0x140] sm:$0xff]
        %v268 = vld [vmem:[%s210 + $0x148] sm:$0xff]
        %v269 = vld [vmem:[%s210 + $0x150] sm:$0xff]
        %v270 = vld [vmem:[%s210 + $0x158] sm:$0xff]
        %v271 = vld [vmem:[%s210 + $0x160] sm:$0xff]
        %v272 = vld [vmem:[%s210 + $0x168] sm:$0xff]
        %v273 = vld [vmem:[%s210 + $0x170] sm:$0xff]
        %v274 = vld [vmem:[%s210 + $0x178] sm:$0xff]
        %v275 = vld [vmem:[%s222] sm:$0xff]
        %v276 = vld [vmem:[%s222 + $0x8] sm:$0xff]
        %v277 = vld [vmem:[%s222 + $0x10] sm:$0xff]
        %v278 = vld [vmem:[%s222 + $0x18] sm:$0xff]
        %v279 = vld [vmem:[%s222 + $0x20] sm:$0xff]
        %v280 = vld [vmem:[%s222 + $0x28] sm:$0xff]
        %v281 = vld [vmem:[%s222 + $0x30] sm:$0xff]
        %v282 = vld [vmem:[%s222 + $0x38] sm:$0xff]
        %v283 = vld [vmem:[%s222 + $0x40] sm:$0xff]
        %v284 = vld [vmem:[%s222 + $0x48] sm:$0xff]
        %v285 = vld [vmem:[%s222 + $0x50] sm:$0xff]
        %v286 = vld [vmem:[%s222 + $0x58] sm:$0xff]
        %v287 = vld [vmem:[%s222 + $0x60] sm:$0xff]
        %v288 = vld [vmem:[%s222 + $0x68] sm:$0xff]
        %v289 = vld [vmem:[%s222 + $0x70] sm:$0xff]
        %v290 = vld [vmem:[%s222 + $0x78] sm:$0xff]
        %v291 = vld [vmem:[%s222 + $0x80] sm:$0xff]
        %v292 = vld [vmem:[%s222 + $0x88] sm:$0xff]
        %v293 = vld [vmem:[%s222 + $0x90] sm:$0xff]
        %v294 = vld [vmem:[%s222 + $0x98] sm:$0xff]
        %v295 = vld [vmem:[%s222 + $0xa0] sm:$0xff]
        %v296 = vld [vmem:[%s222 + $0xa8] sm:$0xff]
        %v297 = vld [vmem:[%s222 + $0xb0] sm:$0xff]
        %v298 = vld [vmem:[%s222 + $0xb8] sm:$0xff]
        %v299 = vld [vmem:[%s222 + $0xc0] sm:$0xff]
        %v300 = vld [vmem:[%s222 + $0xc8] sm:$0xff]
        %v301 = vld [vmem:[%s222 + $0xd0] sm:$0xff]
        %v302 = vld [vmem:[%s222 + $0xd8] sm:$0xff]
        %v303 = vld [vmem:[%s222 + $0xe0] sm:$0xff]
        %v304 = vld [vmem:[%s222 + $0xe8] sm:$0xff]
        %v305 = vld [vmem:[%s222 + $0xf0] sm:$0xff]
        %v306 = vld [vmem:[%s222 + $0xf8] sm:$0xff]
        %v307 = vld [vmem:[%s222 + $0x100] sm:$0xff]
        %v308 = vld [vmem:[%s222 + $0x108] sm:$0xff]
        %v309 = vld [vmem:[%s222 + $0x110] sm:$0xff]
        %v310 = vld [vmem:[%s222 + $0x118] sm:$0xff]
        %v311 = vld [vmem:[%s222 + $0x120] sm:$0xff]
        %v312 = vld [vmem:[%s222 + $0x128] sm:$0xff]
        %v313 = vld [vmem:[%s222 + $0x130] sm:$0xff]
        %v314 = vld [vmem:[%s222 + $0x138] sm:$0xff]
        %v315 = vld [vmem:[%s222 + $0x140] sm:$0xff]
        %v316 = vld [vmem:[%s222 + $0x148] sm:$0xff]
        %v317 = vld [vmem:[%s222 + $0x150] sm:$0xff]
        %v318 = vld [vmem:[%s222 + $0x158] sm:$0xff]
        %v319 = vld [vmem:[%s222 + $0x160] sm:$0xff]
        %v320 = vld [vmem:[%s222 + $0x168] sm:$0xff]
        %v321 = vld [vmem:[%s222 + $0x170] sm:$0xff]
        %v322 = vld [vmem:[%s222 + $0x178] sm:$0xff]
        %v323 = vld [vmem:[%s222 + $0x180] sm:$0xff]
        %v324 = vld [vmem:[%s222 + $0x188] sm:$0xff]
        %v325 = vld [vmem:[%s222 + $0x190] sm:$0xff]
        %v326 = vld [vmem:[%s222 + $0x198] sm:$0xff]
        %v327 = vld [vmem:[%s222 + $0x1a0] sm:$0xff]
        %v328 = vld [vmem:[%s222 + $0x1a8] sm:$0xff]
        %v329 = vld [vmem:[%s222 + $0x1b0] sm:$0xff]
        %v330 = vld [vmem:[%s222 + $0x1b8] sm:$0xff]
        %v331 = vld [vmem:[%s222 + $0x1c0] sm:$0xff]
        %v332 = vld [vmem:[%s222 + $0x1c8] sm:$0xff]
        %v333 = vld [vmem:[%s222 + $0x1d0] sm:$0xff]
        %v334 = vld [vmem:[%s222 + $0x1d8] sm:$0xff]
        %vm335 = vcmask 261120
        %v337 = vsel %vm335, %v228, 0
        %v340 = vsel %vm335, %v230, 0
        %v343 = vsel %vm335, %v232, 0
        %v346 = vsel %vm335, %v234, 0
        %v349 = vsel %vm335, %v236, 0
        %v352 = vsel %vm335, %v238, 0
        %v355 = vsel %vm335, %v240, 0
        %v358 = vsel %vm335, %v242, 0
        %v361 = vsel %vm335, %v244, 0
        %v364 = vsel %vm335, %v246, 0
        %v367 = vsel %vm335, %v248, 0
        %v370 = vsel %vm335, %v250, 0
        %v373 = vsel %vm335, %v252, 0
        %v376 = vsel %vm335, %v254, 0
        %v379 = vsel %vm335, %v256, 0
        %v382 = vsel %vm335, %v258, 0
        %v385 = vsel %vm335, %v260, 0
        %v388 = vsel %vm335, %v262, 0
        %v391 = vsel %vm335, %v264, 0
        %v394 = vsel %vm335, %v266, 0
        %v397 = vsel %vm335, %v268, 0
        %v400 = vsel %vm335, %v270, 0
        %v403 = vsel %vm335, %v272, 0
        %v406 = vsel %vm335, %v274, 0
        %408 = vmatpush.msra.mxu0 %v320
        %409 = vmatpush.msra.mxu0 %v317
        %410 = vmatpush.msra.mxu0 %v314
        %411 = vmatpush.msra.mxu0 %v311
        %412 = vmatpush.msra.mxu0 %v308
        %413 = vmatpush.msra.mxu0 %v305
        %414 = vmatpush.msra.mxu0 %v302
        %415 = vmatpush.msra.mxu0 %v299
        %416 = vmatpush.msra.mxu0 %v296
        %417 = vmatpush.msra.mxu0 %v293
        %418 = vmatpush.msra.mxu0 %v290
        %419 = vmatpush.msra.mxu0 %v287
        %420 = vmatpush.msra.mxu0 %v284
        %421 = vmatpush.msra.mxu0 %v281
        %422 = vmatpush.msra.mxu0 %v278
        %423 = vmatpush.msra.mxu0 %v275
        %424 = vmatmul.f32.gmra.mxu0 %v227
        %v425 = vpop.f32.mrf.mxu0
        %v426 = vadd.f32 0.0, %v425
        %427 = vmatmul.f32.gmra.mxu0 %v229
        %v428 = vpop.f32.mrf.mxu0
        %v429 = vadd.f32 0.0, %v428
        %430 = vmatmul.f32.gmra.mxu0 %v231
        %v431 = vpop.f32.mrf.mxu0
        %v432 = vadd.f32 0.0, %v431
        %433 = vmatmul.f32.gmra.mxu0 %v233
        %v434 = vpop.f32.mrf.mxu0
        %v435 = vadd.f32 0.0, %v434
        %436 = vmatmul.f32.gmra.mxu0 %v235
        %v437 = vpop.f32.mrf.mxu0
        %v438 = vadd.f32 0.0, %v437
        %439 = vmatmul.f32.gmra.mxu0 %v237
        %v440 = vpop.f32.mrf.mxu0
        %v441 = vadd.f32 0.0, %v440
        %442 = vmatmul.f32.gmra.mxu0 %v239
        %v443 = vpop.f32.mrf.mxu0
        %v444 = vadd.f32 0.0, %v443
        %445 = vmatmul.f32.gmra.mxu0 %v241
        %v446 = vpop.f32.mrf.mxu0
        %v447 = vadd.f32 0.0, %v446
        %448 = vmatmul.f32.gmra.mxu0 %v243
        %v449 = vpop.f32.mrf.mxu0
        %v450 = vadd.f32 0.0, %v449
        %451 = vmatmul.f32.gmra.mxu0 %v245
        %v452 = vpop.f32.mrf.mxu0
        %v453 = vadd.f32 0.0, %v452
        %454 = vmatmul.f32.gmra.mxu0 %v247
        %v455 = vpop.f32.mrf.mxu0
        %v456 = vadd.f32 0.0, %v455
        %457 = vmatmul.f32.gmra.mxu0 %v249
        %v458 = vpop.f32.mrf.mxu0
        %v459 = vadd.f32 0.0, %v458
        %460 = vmatmul.f32.gmra.mxu0 %v251
        %v461 = vpop.f32.mrf.mxu0
        %v462 = vadd.f32 0.0, %v461
        %463 = vmatmul.f32.gmra.mxu0 %v253
        %v464 = vpop.f32.mrf.mxu0
        %v465 = vadd.f32 0.0, %v464
        %466 = vmatmul.f32.gmra.mxu0 %v255
        %v467 = vpop.f32.mrf.mxu0
        %v468 = vadd.f32 0.0, %v467
        %469 = vmatmul.f32.gmra.mxu0 %v257
        %v470 = vpop.f32.mrf.mxu0
        %v471 = vadd.f32 0.0, %v470
        %472 = vmatmul.f32.gmra.mxu0 %v259
        %v473 = vpop.f32.mrf.mxu0
        %v474 = vadd.f32 0.0, %v473
        %475 = vmatmul.f32.gmra.mxu0 %v261
        %v476 = vpop.f32.mrf.mxu0
        %v477 = vadd.f32 0.0, %v476
        %478 = vmatmul.f32.gmra.mxu0 %v263
        %v479 = vpop.f32.mrf.mxu0
        %v480 = vadd.f32 0.0, %v479
        %481 = vmatmul.f32.gmra.mxu0 %v265
        %v482 = vpop.f32.mrf.mxu0
        %v483 = vadd.f32 0.0, %v482
        %484 = vmatmul.f32.gmra.mxu0 %v267
        %v485 = vpop.f32.mrf.mxu0
        %v486 = vadd.f32 0.0, %v485
        %487 = vmatmul.f32.gmra.mxu0 %v269
        %v488 = vpop.f32.mrf.mxu0
        %v489 = vadd.f32 0.0, %v488
        %490 = vmatmul.f32.gmra.mxu0 %v271
        %v491 = vpop.f32.mrf.mxu0
        %v492 = vadd.f32 0.0, %v491
        %493 = vmatmul.f32.gmra.mxu0 %v273
        %v494 = vpop.f32.mrf.mxu0
        %v495 = vadd.f32 0.0, %v494
        %496 = vdwg.mxu0
        %497 = vmatpush.msra.mxu0 0.0
        %498 = vmatpush.msra.mxu0 0.0
        %499 = vmatpush.msra.mxu0 0.0
        %500 = vmatpush.msra.mxu0 0.0
        %501 = vmatpush.msra.mxu0 0.0
        %502 = vmatpush.msra.mxu0 0.0
        %503 = vmatpush.msra.mxu0 0.0
        %504 = vmatpush.msra.mxu0 0.0
        %505 = vmatpush.msra.mxu0 0.0
        %506 = vmatpush.msra.mxu0 0.0
        %507 = vmatpush.msra.mxu0 0.0
        %508 = vmatpush.msra.mxu0 0.0
        %509 = vmatpush.msra.mxu0 %v332
        %510 = vmatpush.msra.mxu0 %v329
        %511 = vmatpush.msra.mxu0 %v326
        %512 = vmatpush.msra.mxu0 %v323
        %513 = vmatmul.f32.gmra.mxu0 %v337
        %v514 = vpop.f32.mrf.mxu0
        %v515 = vadd.f32 %v426, %v514
        %516 = vmatmul.f32.gmra.mxu0 %v340
        %v517 = vpop.f32.mrf.mxu0
        %v518 = vadd.f32 %v429, %v517
        %519 = vmatmul.f32.gmra.mxu0 %v343
        %v520 = vpop.f32.mrf.mxu0
        %v521 = vadd.f32 %v432, %v520
        %522 = vmatmul.f32.gmra.mxu0 %v346
        %v523 = vpop.f32.mrf.mxu0
        %v524 = vadd.f32 %v435, %v523
        %525 = vmatmul.f32.gmra.mxu0 %v349
        %v526 = vpop.f32.mrf.mxu0
        %v527 = vadd.f32 %v438, %v526
        %528 = vmatmul.f32.gmra.mxu0 %v352
        %v529 = vpop.f32.mrf.mxu0
        %v530 = vadd.f32 %v441, %v529
        %531 = vmatmul.f32.gmra.mxu0 %v355
        %v532 = vpop.f32.mrf.mxu0
        %v533 = vadd.f32 %v444, %v532
        %534 = vmatmul.f32.gmra.mxu0 %v358
        %v535 = vpop.f32.mrf.mxu0
        %v536 = vadd.f32 %v447, %v535
        %537 = vmatmul.f32.gmra.mxu0 %v361
        %v538 = vpop.f32.mrf.mxu0
        %v539 = vadd.f32 %v450, %v538
        %540 = vmatmul.f32.gmra.mxu0 %v364
        %v541 = vpop.f32.mrf.mxu0
        %v542 = vadd.f32 %v453, %v541
        %543 = vmatmul.f32.gmra.mxu0 %v367
        %v544 = vpop.f32.mrf.mxu0
        %v545 = vadd.f32 %v456, %v544
        %546 = vmatmul.f32.gmra.mxu0 %v370
        %v547 = vpop.f32.mrf.mxu0
        %v548 = vadd.f32 %v459, %v547
        %549 = vmatmul.f32.gmra.mxu0 %v373
        %v550 = vpop.f32.mrf.mxu0
        %v551 = vadd.f32 %v462, %v550
        %552 = vmatmul.f32.gmra.mxu0 %v376
        %v553 = vpop.f32.mrf.mxu0
        %v554 = vadd.f32 %v465, %v553
        %555 = vmatmul.f32.gmra.mxu0 %v379
        %v556 = vpop.f32.mrf.mxu0
        %v557 = vadd.f32 %v468, %v556
        %558 = vmatmul.f32.gmra.mxu0 %v382
        %v559 = vpop.f32.mrf.mxu0
        %v560 = vadd.f32 %v471, %v559
        %561 = vmatmul.f32.gmra.mxu0 %v385
        %v562 = vpop.f32.mrf.mxu0
        %v563 = vadd.f32 %v474, %v562
        %564 = vmatmul.f32.gmra.mxu0 %v388
        %v565 = vpop.f32.mrf.mxu0
        %v566 = vadd.f32 %v477, %v565
        %567 = vmatmul.f32.gmra.mxu0 %v391
        %v568 = vpop.f32.mrf.mxu0
        %v569 = vadd.f32 %v480, %v568
        %570 = vmatmul.f32.gmra.mxu0 %v394
        %v571 = vpop.f32.mrf.mxu0
        %v572 = vadd.f32 %v483, %v571
        %573 = vmatmul.f32.gmra.mxu0 %v397
        %v574 = vpop.f32.mrf.mxu0
        %v575 = vadd.f32 %v486, %v574
        %576 = vmatmul.f32.gmra.mxu0 %v400
        %v577 = vpop.f32.mrf.mxu0
        %v578 = vadd.f32 %v489, %v577
        %579 = vmatmul.f32.gmra.mxu0 %v403
        %v580 = vpop.f32.mrf.mxu0
        %v581 = vadd.f32 %v492, %v580
        %582 = vmatmul.f32.gmra.mxu0 %v406
        %v583 = vpop.f32.mrf.mxu0
        %v584 = vadd.f32 %v495, %v583
        %585 = vdwg.mxu0
        %586 = vmatpush.msra.mxu0 %v321
        %587 = vmatpush.msra.mxu0 %v318
        %588 = vmatpush.msra.mxu0 %v315
        %589 = vmatpush.msra.mxu0 %v312
        %590 = vmatpush.msra.mxu0 %v309
        %591 = vmatpush.msra.mxu0 %v306
        %592 = vmatpush.msra.mxu0 %v303
        %593 = vmatpush.msra.mxu0 %v300
        %594 = vmatpush.msra.mxu0 %v297
        %595 = vmatpush.msra.mxu0 %v294
        %596 = vmatpush.msra.mxu0 %v291
        %597 = vmatpush.msra.mxu0 %v288
        %598 = vmatpush.msra.mxu0 %v285
        %599 = vmatpush.msra.mxu0 %v282
        %600 = vmatpush.msra.mxu0 %v279
        %601 = vmatpush.msra.mxu0 %v276
        %602 = vmatmul.f32.gmra.mxu0 %v227
        %v603 = vpop.f32.mrf.mxu0
        %v604 = vadd.f32 0.0, %v603
        %605 = vmatmul.f32.gmra.mxu0 %v229
        %v606 = vpop.f32.mrf.mxu0
        %v607 = vadd.f32 0.0, %v606
        %608 = vmatmul.f32.gmra.mxu0 %v231
        %v609 = vpop.f32.mrf.mxu0
        %v610 = vadd.f32 0.0, %v609
        %611 = vmatmul.f32.gmra.mxu0 %v233
        %v612 = vpop.f32.mrf.mxu0
        %v613 = vadd.f32 0.0, %v612
        %614 = vmatmul.f32.gmra.mxu0 %v235
        %v615 = vpop.f32.mrf.mxu0
        %v616 = vadd.f32 0.0, %v615
        %617 = vmatmul.f32.gmra.mxu0 %v237
        %v618 = vpop.f32.mrf.mxu0
        %v619 = vadd.f32 0.0, %v618
        %620 = vmatmul.f32.gmra.mxu0 %v239
        %v621 = vpop.f32.mrf.mxu0
        %v622 = vadd.f32 0.0, %v621
        %623 = vmatmul.f32.gmra.mxu0 %v241
        %v624 = vpop.f32.mrf.mxu0
        %v625 = vadd.f32 0.0, %v624
        %626 = vmatmul.f32.gmra.mxu0 %v243
        %v627 = vpop.f32.mrf.mxu0
        %v628 = vadd.f32 0.0, %v627
        %629 = vmatmul.f32.gmra.mxu0 %v245
        %v630 = vpop.f32.mrf.mxu0
        %v631 = vadd.f32 0.0, %v630
        %632 = vmatmul.f32.gmra.mxu0 %v247
        %v633 = vpop.f32.mrf.mxu0
        %v634 = vadd.f32 0.0, %v633
        %635 = vmatmul.f32.gmra.mxu0 %v249
        %v636 = vpop.f32.mrf.mxu0
        %v637 = vadd.f32 0.0, %v636
        %638 = vmatmul.f32.gmra.mxu0 %v251
        %v639 = vpop.f32.mrf.mxu0
        %v640 = vadd.f32 0.0, %v639
        %641 = vmatmul.f32.gmra.mxu0 %v253
        %v642 = vpop.f32.mrf.mxu0
        %v643 = vadd.f32 0.0, %v642
        %644 = vmatmul.f32.gmra.mxu0 %v255
        %v645 = vpop.f32.mrf.mxu0
        %v646 = vadd.f32 0.0, %v645
        %647 = vmatmul.f32.gmra.mxu0 %v257
        %v648 = vpop.f32.mrf.mxu0
        %v649 = vadd.f32 0.0, %v648
        %650 = vmatmul.f32.gmra.mxu0 %v259
        %v651 = vpop.f32.mrf.mxu0
        %v652 = vadd.f32 0.0, %v651
        %653 = vmatmul.f32.gmra.mxu0 %v261
        %v654 = vpop.f32.mrf.mxu0
        %v655 = vadd.f32 0.0, %v654
        %656 = vmatmul.f32.gmra.mxu0 %v263
        %v657 = vpop.f32.mrf.mxu0
        %v658 = vadd.f32 0.0, %v657
        %659 = vmatmul.f32.gmra.mxu0 %v265
        %v660 = vpop.f32.mrf.mxu0
        %v661 = vadd.f32 0.0, %v660
        %662 = vmatmul.f32.gmra.mxu0 %v267
        %v663 = vpop.f32.mrf.mxu0
        %v664 = vadd.f32 0.0, %v663
        %665 = vmatmul.f32.gmra.mxu0 %v269
        %v666 = vpop.f32.mrf.mxu0
        %v667 = vadd.f32 0.0, %v666
        %668 = vmatmul.f32.gmra.mxu0 %v271
        %v669 = vpop.f32.mrf.mxu0
        %v670 = vadd.f32 0.0, %v669
        %671 = vmatmul.f32.gmra.mxu0 %v273
        %v672 = vpop.f32.mrf.mxu0
        %v673 = vadd.f32 0.0, %v672
        %674 = vdwg.mxu0
        %675 = vmatpush.msra.mxu0 0.0
        %676 = vmatpush.msra.mxu0 0.0
        %677 = vmatpush.msra.mxu0 0.0
        %678 = vmatpush.msra.mxu0 0.0
        %679 = vmatpush.msra.mxu0 0.0
        %680 = vmatpush.msra.mxu0 0.0
        %681 = vmatpush.msra.mxu0 0.0
        %682 = vmatpush.msra.mxu0 0.0
        %683 = vmatpush.msra.mxu0 0.0
        %684 = vmatpush.msra.mxu0 0.0
        %685 = vmatpush.msra.mxu0 0.0
        %686 = vmatpush.msra.mxu0 0.0
        %687 = vmatpush.msra.mxu0 %v333
        %688 = vmatpush.msra.mxu0 %v330
        %689 = vmatpush.msra.mxu0 %v327
        %690 = vmatpush.msra.mxu0 %v324
        %691 = vmatmul.f32.gmra.mxu0 %v337
        %v692 = vpop.f32.mrf.mxu0
        %v693 = vadd.f32 %v604, %v692
        %694 = vmatmul.f32.gmra.mxu0 %v340
        %v695 = vpop.f32.mrf.mxu0
        %v696 = vadd.f32 %v607, %v695
        %697 = vmatmul.f32.gmra.mxu0 %v343
        %v698 = vpop.f32.mrf.mxu0
        %v699 = vadd.f32 %v610, %v698
        %700 = vmatmul.f32.gmra.mxu0 %v346
        %v701 = vpop.f32.mrf.mxu0
        %v702 = vadd.f32 %v613, %v701
        %703 = vmatmul.f32.gmra.mxu0 %v349
        %v704 = vpop.f32.mrf.mxu0
        %v705 = vadd.f32 %v616, %v704
        %706 = vmatmul.f32.gmra.mxu0 %v352
        %v707 = vpop.f32.mrf.mxu0
        %v708 = vadd.f32 %v619, %v707
        %709 = vmatmul.f32.gmra.mxu0 %v355
        %v710 = vpop.f32.mrf.mxu0
        %v711 = vadd.f32 %v622, %v710
        %712 = vmatmul.f32.gmra.mxu0 %v358
        %v713 = vpop.f32.mrf.mxu0
        %v714 = vadd.f32 %v625, %v713
        %715 = vmatmul.f32.gmra.mxu0 %v361
        %v716 = vpop.f32.mrf.mxu0
        %v717 = vadd.f32 %v628, %v716
        %718 = vmatmul.f32.gmra.mxu0 %v364
        %v719 = vpop.f32.mrf.mxu0
        %v720 = vadd.f32 %v631, %v719
        %721 = vmatmul.f32.gmra.mxu0 %v367
        %v722 = vpop.f32.mrf.mxu0
        %v723 = vadd.f32 %v634, %v722
        %724 = vmatmul.f32.gmra.mxu0 %v370
        %v725 = vpop.f32.mrf.mxu0
        %v726 = vadd.f32 %v637, %v725
        %727 = vmatmul.f32.gmra.mxu0 %v373
        %v728 = vpop.f32.mrf.mxu0
        %v729 = vadd.f32 %v640, %v728
        %730 = vmatmul.f32.gmra.mxu0 %v376
        %v731 = vpop.f32.mrf.mxu0
        %v732 = vadd.f32 %v643, %v731
        %733 = vmatmul.f32.gmra.mxu0 %v379
        %v734 = vpop.f32.mrf.mxu0
        %v735 = vadd.f32 %v646, %v734
        %736 = vmatmul.f32.gmra.mxu0 %v382
        %v737 = vpop.f32.mrf.mxu0
        %v738 = vadd.f32 %v649, %v737
        %739 = vmatmul.f32.gmra.mxu0 %v385
        %v740 = vpop.f32.mrf.mxu0
        %v741 = vadd.f32 %v652, %v740
        %742 = vmatmul.f32.gmra.mxu0 %v388
        %v743 = vpop.f32.mrf.mxu0
        %v744 = vadd.f32 %v655, %v743
        %745 = vmatmul.f32.gmra.mxu0 %v391
        %v746 = vpop.f32.mrf.mxu0
        %v747 = vadd.f32 %v658, %v746
        %748 = vmatmul.f32.gmra.mxu0 %v394
        %v749 = vpop.f32.mrf.mxu0
        %v750 = vadd.f32 %v661, %v749
        %751 = vmatmul.f32.gmra.mxu0 %v397
        %v752 = vpop.f32.mrf.mxu0
        %v753 = vadd.f32 %v664, %v752
        %754 = vmatmul.f32.gmra.mxu0 %v400
        %v755 = vpop.f32.mrf.mxu0
        %v756 = vadd.f32 %v667, %v755
        %757 = vmatmul.f32.gmra.mxu0 %v403
        %v758 = vpop.f32.mrf.mxu0
        %v759 = vadd.f32 %v670, %v758
        %760 = vmatmul.f32.gmra.mxu0 %v406
        %v761 = vpop.f32.mrf.mxu0
        %v762 = vadd.f32 %v673, %v761
        %763 = vdwg.mxu0
        %764 = vmatpush.msra.mxu0 %v322
        %765 = vmatpush.msra.mxu0 %v319
        %766 = vmatpush.msra.mxu0 %v316
        %767 = vmatpush.msra.mxu0 %v313
        %768 = vmatpush.msra.mxu0 %v310
        %769 = vmatpush.msra.mxu0 %v307
        %770 = vmatpush.msra.mxu0 %v304
        %771 = vmatpush.msra.mxu0 %v301
        %772 = vmatpush.msra.mxu0 %v298
        %773 = vmatpush.msra.mxu0 %v295
        %774 = vmatpush.msra.mxu0 %v292
        %775 = vmatpush.msra.mxu0 %v289
        %776 = vmatpush.msra.mxu0 %v286
        %777 = vmatpush.msra.mxu0 %v283
        %778 = vmatpush.msra.mxu0 %v280
        %779 = vmatpush.msra.mxu0 %v277
        %780 = vmatmul.f32.gmra.mxu0 %v227
        %v781 = vpop.f32.mrf.mxu0
        %v782 = vadd.f32 0.0, %v781
        %783 = vmatmul.f32.gmra.mxu0 %v229
        %v784 = vpop.f32.mrf.mxu0
        %v785 = vadd.f32 0.0, %v784
        %786 = vmatmul.f32.gmra.mxu0 %v231
        %v787 = vpop.f32.mrf.mxu0
        %v788 = vadd.f32 0.0, %v787
        %789 = vmatmul.f32.gmra.mxu0 %v233
        %v790 = vpop.f32.mrf.mxu0
        %v791 = vadd.f32 0.0, %v790
        %792 = vmatmul.f32.gmra.mxu0 %v235
        %v793 = vpop.f32.mrf.mxu0
        %v794 = vadd.f32 0.0, %v793
        %795 = vmatmul.f32.gmra.mxu0 %v237
        %v796 = vpop.f32.mrf.mxu0
        %v797 = vadd.f32 0.0, %v796
        %798 = vmatmul.f32.gmra.mxu0 %v239
        %v799 = vpop.f32.mrf.mxu0
        %v800 = vadd.f32 0.0, %v799
        %801 = vmatmul.f32.gmra.mxu0 %v241
        %v802 = vpop.f32.mrf.mxu0
        %v803 = vadd.f32 0.0, %v802
        %804 = vmatmul.f32.gmra.mxu0 %v243
        %v805 = vpop.f32.mrf.mxu0
        %v806 = vadd.f32 0.0, %v805
        %807 = vmatmul.f32.gmra.mxu0 %v245
        %v808 = vpop.f32.mrf.mxu0
        %v809 = vadd.f32 0.0, %v808
        %810 = vmatmul.f32.gmra.mxu0 %v247
        %v811 = vpop.f32.mrf.mxu0
        %v812 = vadd.f32 0.0, %v811
        %813 = vmatmul.f32.gmra.mxu0 %v249
        %v814 = vpop.f32.mrf.mxu0
        %v815 = vadd.f32 0.0, %v814
        %816 = vmatmul.f32.gmra.mxu0 %v251
        %v817 = vpop.f32.mrf.mxu0
        %v818 = vadd.f32 0.0, %v817
        %819 = vmatmul.f32.gmra.mxu0 %v253
        %v820 = vpop.f32.mrf.mxu0
        %v821 = vadd.f32 0.0, %v820
        %822 = vmatmul.f32.gmra.mxu0 %v255
        %v823 = vpop.f32.mrf.mxu0
        %v824 = vadd.f32 0.0, %v823
        %825 = vmatmul.f32.gmra.mxu0 %v257
        %v826 = vpop.f32.mrf.mxu0
        %v827 = vadd.f32 0.0, %v826
        %828 = vmatmul.f32.gmra.mxu0 %v259
        %v829 = vpop.f32.mrf.mxu0
        %v830 = vadd.f32 0.0, %v829
        %831 = vmatmul.f32.gmra.mxu0 %v261
        %v832 = vpop.f32.mrf.mxu0
        %v833 = vadd.f32 0.0, %v832
        %834 = vmatmul.f32.gmra.mxu0 %v263
        %v835 = vpop.f32.mrf.mxu0
        %v836 = vadd.f32 0.0, %v835
        %837 = vmatmul.f32.gmra.mxu0 %v265
        %v838 = vpop.f32.mrf.mxu0
        %v839 = vadd.f32 0.0, %v838
        %840 = vmatmul.f32.gmra.mxu0 %v267
        %v841 = vpop.f32.mrf.mxu0
        %v842 = vadd.f32 0.0, %v841
        %843 = vmatmul.f32.gmra.mxu0 %v269
        %v844 = vpop.f32.mrf.mxu0
        %v845 = vadd.f32 0.0, %v844
        %846 = vmatmul.f32.gmra.mxu0 %v271
        %v847 = vpop.f32.mrf.mxu0
        %v848 = vadd.f32 0.0, %v847
        %849 = vmatmul.f32.gmra.mxu0 %v273
        %v850 = vpop.f32.mrf.mxu0
        %v851 = vadd.f32 0.0, %v850
        %852 = vdwg.mxu0
        %853 = vmatpush.msra.mxu0 0.0
        %854 = vmatpush.msra.mxu0 0.0
        %855 = vmatpush.msra.mxu0 0.0
        %856 = vmatpush.msra.mxu0 0.0
        %857 = vmatpush.msra.mxu0 0.0
        %858 = vmatpush.msra.mxu0 0.0
        %859 = vmatpush.msra.mxu0 0.0
        %860 = vmatpush.msra.mxu0 0.0
        %861 = vmatpush.msra.mxu0 0.0
        %862 = vmatpush.msra.mxu0 0.0
        %863 = vmatpush.msra.mxu0 0.0
        %864 = vmatpush.msra.mxu0 0.0
        %865 = vmatpush.msra.mxu0 %v334
        %866 = vmatpush.msra.mxu0 %v331
        %867 = vmatpush.msra.mxu0 %v328
        %868 = vmatpush.msra.mxu0 %v325
        %869 = vmatmul.f32.gmra.mxu0 %v337
        %v870 = vpop.f32.mrf.mxu0
        %v871 = vadd.f32 %v782, %v870
        %872 = vmatmul.f32.gmra.mxu0 %v340
        %v873 = vpop.f32.mrf.mxu0
        %v874 = vadd.f32 %v785, %v873
        %875 = vmatmul.f32.gmra.mxu0 %v343
        %v876 = vpop.f32.mrf.mxu0
        %v877 = vadd.f32 %v788, %v876
        %878 = vmatmul.f32.gmra.mxu0 %v346
        %v879 = vpop.f32.mrf.mxu0
        %v880 = vadd.f32 %v791, %v879
        %881 = vmatmul.f32.gmra.mxu0 %v349
        %v882 = vpop.f32.mrf.mxu0
        %v883 = vadd.f32 %v794, %v882
        %884 = vmatmul.f32.gmra.mxu0 %v352
        %v885 = vpop.f32.mrf.mxu0
        %v886 = vadd.f32 %v797, %v885
        %887 = vmatmul.f32.gmra.mxu0 %v355
        %v888 = vpop.f32.mrf.mxu0
        %v889 = vadd.f32 %v800, %v888
        %890 = vmatmul.f32.gmra.mxu0 %v358
        %v891 = vpop.f32.mrf.mxu0
        %v892 = vadd.f32 %v803, %v891
        %893 = vmatmul.f32.gmra.mxu0 %v361
        %v894 = vpop.f32.mrf.mxu0
        %v895 = vadd.f32 %v806, %v894
        %896 = vmatmul.f32.gmra.mxu0 %v364
        %v897 = vpop.f32.mrf.mxu0
        %v898 = vadd.f32 %v809, %v897
        %899 = vmatmul.f32.gmra.mxu0 %v367
        %v900 = vpop.f32.mrf.mxu0
        %v901 = vadd.f32 %v812, %v900
        %902 = vmatmul.f32.gmra.mxu0 %v370
        %v903 = vpop.f32.mrf.mxu0
        %v904 = vadd.f32 %v815, %v903
        %905 = vmatmul.f32.gmra.mxu0 %v373
        %v906 = vpop.f32.mrf.mxu0
        %v907 = vadd.f32 %v818, %v906
        %908 = vmatmul.f32.gmra.mxu0 %v376
        %v909 = vpop.f32.mrf.mxu0
        %v910 = vadd.f32 %v821, %v909
        %911 = vmatmul.f32.gmra.mxu0 %v379
        %v912 = vpop.f32.mrf.mxu0
        %v913 = vadd.f32 %v824, %v912
        %914 = vmatmul.f32.gmra.mxu0 %v382
        %v915 = vpop.f32.mrf.mxu0
        %v916 = vadd.f32 %v827, %v915
        %917 = vmatmul.f32.gmra.mxu0 %v385
        %v918 = vpop.f32.mrf.mxu0
        %v919 = vadd.f32 %v830, %v918
        %920 = vmatmul.f32.gmra.mxu0 %v388
        %v921 = vpop.f32.mrf.mxu0
        %v922 = vadd.f32 %v833, %v921
        %923 = vmatmul.f32.gmra.mxu0 %v391
        %v924 = vpop.f32.mrf.mxu0
        %v925 = vadd.f32 %v836, %v924
        %926 = vmatmul.f32.gmra.mxu0 %v394
        %v927 = vpop.f32.mrf.mxu0
        %v928 = vadd.f32 %v839, %v927
        %929 = vmatmul.f32.gmra.mxu0 %v397
        %v930 = vpop.f32.mrf.mxu0
        %v931 = vadd.f32 %v842, %v930
        %932 = vmatmul.f32.gmra.mxu0 %v400
        %v933 = vpop.f32.mrf.mxu0
        %v934 = vadd.f32 %v845, %v933
        %935 = vmatmul.f32.gmra.mxu0 %v403
        %v936 = vpop.f32.mrf.mxu0
        %v937 = vadd.f32 %v848, %v936
        %938 = vmatmul.f32.gmra.mxu0 %v406
        %v939 = vpop.f32.mrf.mxu0
        %v940 = vadd.f32 %v851, %v939
        %941 = vdwg.mxu0
        %p942 = scmp.eq.s32.totalorder %s23, 0
        // Predicated region
        $region29: #{tpu_custom_call.1} parent=27 // pred_check
          %p943 = pneg %p942
        $region30: #{tpu_custom_call.1} parent=27 // pred_check_branch
          %945 = sbr.rel (%p943) target = $region32
        $region31: #{tpu_custom_call.1} parent=27 // pred_region
          %946 = vst [vmem:[%s200] sm:$0xff] %v515
          %947 = vst [vmem:[%s200 + $0x8] sm:$0xff] %v693
          %948 = vst [vmem:[%s200 + $0x10] sm:$0xff] %v871
          %949 = vst [vmem:[%s200 + $0x18] sm:$0xff] %v518
          %950 = vst [vmem:[%s200 + $0x20] sm:$0xff] %v696
          %951 = vst [vmem:[%s200 + $0x28] sm:$0xff] %v874
          %952 = vst [vmem:[%s200 + $0x30] sm:$0xff] %v521
          %953 = vst [vmem:[%s200 + $0x38] sm:$0xff] %v699
          %954 = vst [vmem:[%s200 + $0x40] sm:$0xff] %v877
          %955 = vst [vmem:[%s200 + $0x48] sm:$0xff] %v524
          %956 = vst [vmem:[%s200 + $0x50] sm:$0xff] %v702
          %957 = vst [vmem:[%s200 + $0x58] sm:$0xff] %v880
          %958 = vst [vmem:[%s200 + $0x60] sm:$0xff] %v527
          %959 = vst [vmem:[%s200 + $0x68] sm:$0xff] %v705
          %960 = vst [vmem:[%s200 + $0x70] sm:$0xff] %v883
          %961 = vst [vmem:[%s200 + $0x78] sm:$0xff] %v530
          %962 = vst [vmem:[%s200 + $0x80] sm:$0xff] %v708
          %963 = vst [vmem:[%s200 + $0x88] sm:$0xff] %v886
          %964 = vst [vmem:[%s200 + $0x90] sm:$0xff] %v533
          %965 = vst [vmem:[%s200 + $0x98] sm:$0xff] %v711
          %966 = vst [vmem:[%s200 + $0xa0] sm:$0xff] %v889
          %967 = vst [vmem:[%s200 + $0xa8] sm:$0xff] %v536
          %968 = vst [vmem:[%s200 + $0xb0] sm:$0xff] %v714
          %969 = vst [vmem:[%s200 + $0xb8] sm:$0xff] %v892
          %970 = vst [vmem:[%s200 + $0xc0] sm:$0xff] %v539
          %971 = vst [vmem:[%s200 + $0xc8] sm:$0xff] %v717
          %972 = vst [vmem:[%s200 + $0xd0] sm:$0xff] %v895
          %973 = vst [vmem:[%s200 + $0xd8] sm:$0xff] %v542
          %974 = vst [vmem:[%s200 + $0xe0] sm:$0xff] %v720
          %975 = vst [vmem:[%s200 + $0xe8] sm:$0xff] %v898
          %976 = vst [vmem:[%s200 + $0xf0] sm:$0xff] %v545
          %977 = vst [vmem:[%s200 + $0xf8] sm:$0xff] %v723
          %978 = vst [vmem:[%s200 + $0x100] sm:$0xff] %v901
          %979 = vst [vmem:[%s200 + $0x108] sm:$0xff] %v548
          %980 = vst [vmem:[%s200 + $0x110] sm:$0xff] %v726
          %981 = vst [vmem:[%s200 + $0x118] sm:$0xff] %v904
          %982 = vst [vmem:[%s200 + $0x120] sm:$0xff] %v551
          %983 = vst [vmem:[%s200 + $0x128] sm:$0xff] %v729
          %984 = vst [vmem:[%s200 + $0x130] sm:$0xff] %v907
          %985 = vst [vmem:[%s200 + $0x138] sm:$0xff] %v554
          %986 = vst [vmem:[%s200 + $0x140] sm:$0xff] %v732
          %987 = vst [vmem:[%s200 + $0x148] sm:$0xff] %v910
          %988 = vst [vmem:[%s200 + $0x150] sm:$0xff] %v557
          %989 = vst [vmem:[%s200 + $0x158] sm:$0xff] %v735
          %990 = vst [vmem:[%s200 + $0x160] sm:$0xff] %v913
          %991 = vst [vmem:[%s200 + $0x168] sm:$0xff] %v560
          %992 = vst [vmem:[%s200 + $0x170] sm:$0xff] %v738
          %993 = vst [vmem:[%s200 + $0x178] sm:$0xff] %v916
          %994 = vst [vmem:[%s200 + $0x180] sm:$0xff] %v563
          %995 = vst [vmem:[%s200 + $0x188] sm:$0xff] %v741
          %996 = vst [vmem:[%s200 + $0x190] sm:$0xff] %v919
          %997 = vst [vmem:[%s200 + $0x198] sm:$0xff] %v566
          %998 = vst [vmem:[%s200 + $0x1a0] sm:$0xff] %v744
          %999 = vst [vmem:[%s200 + $0x1a8] sm:$0xff] %v922
          %1000 = vst [vmem:[%s200 + $0x1b0] sm:$0xff] %v569
          %1001 = vst [vmem:[%s200 + $0x1b8] sm:$0xff] %v747
          %1002 = vst [vmem:[%s200 + $0x1c0] sm:$0xff] %v925
          %1003 = vst [vmem:[%s200 + $0x1c8] sm:$0xff] %v572
          %1004 = vst [vmem:[%s200 + $0x1d0] sm:$0xff] %v750
          %1005 = vst [vmem:[%s200 + $0x1d8] sm:$0xff] %v928
          %1006 = vst [vmem:[%s200 + $0x1e0] sm:$0xff] %v575
          %1007 = vst [vmem:[%s200 + $0x1e8] sm:$0xff] %v753
          %1008 = vst [vmem:[%s200 + $0x1f0] sm:$0xff] %v931
          %1009 = vst [vmem:[%s200 + $0x1f8] sm:$0xff] %v578
          %1010 = vst [vmem:[%s200 + $0x200] sm:$0xff] %v756
          %1011 = vst [vmem:[%s200 + $0x208] sm:$0xff] %v934
          %1012 = vst [vmem:[%s200 + $0x210] sm:$0xff] %v581
          %1013 = vst [vmem:[%s200 + $0x218] sm:$0xff] %v759
          %1014 = vst [vmem:[%s200 + $0x220] sm:$0xff] %v937
          %1015 = vst [vmem:[%s200 + $0x228] sm:$0xff] %v584
          %1016 = vst [vmem:[%s200 + $0x230] sm:$0xff] %v762
          %1017 = vst [vmem:[%s200 + $0x238] sm:$0xff] %v940
        $region32: #{tpu_custom_call.1} parent=27 // pred_fallthru
          _
        %p1018 = scmp.gt.s32.totalorder %s23, 0
        // Predicated region
        $region33: #{tpu_custom_call.1} parent=27 // pred_check
          %p1019 = pneg %p1018
        $region34: #{tpu_custom_call.1} parent=27 // pred_check_branch
          %1021 = sbr.rel (%p1019) target = $region36
        $region35: #{tpu_custom_call.1} parent=27 // pred_region
          %v1022 = vld [vmem:[%s200] sm:$0xff]
          %v1023 = vld [vmem:[%s200 + $0x8] sm:$0xff]
          %v1024 = vld [vmem:[%s200 + $0x10] sm:$0xff]
          %v1025 = vld [vmem:[%s200 + $0x18] sm:$0xff]
          %v1026 = vld [vmem:[%s200 + $0x20] sm:$0xff]
          %v1027 = vld [vmem:[%s200 + $0x28] sm:$0xff]
          %v1028 = vld [vmem:[%s200 + $0x30] sm:$0xff]
          %v1029 = vld [vmem:[%s200 + $0x38] sm:$0xff]
          %v1030 = vld [vmem:[%s200 + $0x40] sm:$0xff]
          %v1031 = vld [vmem:[%s200 + $0x48] sm:$0xff]
          %v1032 = vld [vmem:[%s200 + $0x50] sm:$0xff]
          %v1033 = vld [vmem:[%s200 + $0x58] sm:$0xff]
          %v1034 = vld [vmem:[%s200 + $0x60] sm:$0xff]
          %v1035 = vld [vmem:[%s200 + $0x68] sm:$0xff]
          %v1036 = vld [vmem:[%s200 + $0x70] sm:$0xff]
          %v1037 = vld [vmem:[%s200 + $0x78] sm:$0xff]
          %v1038 = vld [vmem:[%s200 + $0x80] sm:$0xff]
          %v1039 = vld [vmem:[%s200 + $0x88] sm:$0xff]
          %v1040 = vld [vmem:[%s200 + $0x90] sm:$0xff]
          %v1041 = vld [vmem:[%s200 + $0x98] sm:$0xff]
          %v1042 = vld [vmem:[%s200 + $0xa0] sm:$0xff]
          %v1043 = vld [vmem:[%s200 + $0xa8] sm:$0xff]
          %v1044 = vld [vmem:[%s200 + $0xb0] sm:$0xff]
          %v1045 = vld [vmem:[%s200 + $0xb8] sm:$0xff]
          %v1046 = vld [vmem:[%s200 + $0xc0] sm:$0xff]
          %v1047 = vld [vmem:[%s200 + $0xc8] sm:$0xff]
          %v1048 = vld [vmem:[%s200 + $0xd0] sm:$0xff]
          %v1049 = vld [vmem:[%s200 + $0xd8] sm:$0xff]
          %v1050 = vld [vmem:[%s200 + $0xe0] sm:$0xff]
          %v1051 = vld [vmem:[%s200 + $0xe8] sm:$0xff]
          %v1052 = vld [vmem:[%s200 + $0xf0] sm:$0xff]
          %v1053 = vld [vmem:[%s200 + $0xf8] sm:$0xff]
          %v1054 = vld [vmem:[%s200 + $0x100] sm:$0xff]
          %v1055 = vld [vmem:[%s200 + $0x108] sm:$0xff]
          %v1056 = vld [vmem:[%s200 + $0x110] sm:$0xff]
          %v1057 = vld [vmem:[%s200 + $0x118] sm:$0xff]
          %v1058 = vld [vmem:[%s200 + $0x120] sm:$0xff]
          %v1059 = vld [vmem:[%s200 + $0x128] sm:$0xff]
          %v1060 = vld [vmem:[%s200 + $0x130] sm:$0xff]
          %v1061 = vld [vmem:[%s200 + $0x138] sm:$0xff]
          %v1062 = vld [vmem:[%s200 + $0x140] sm:$0xff]
          %v1063 = vld [vmem:[%s200 + $0x148] sm:$0xff]
          %v1064 = vld [vmem:[%s200 + $0x150] sm:$0xff]
          %v1065 = vld [vmem:[%s200 + $0x158] sm:$0xff]
          %v1066 = vld [vmem:[%s200 + $0x160] sm:$0xff]
          %v1067 = vld [vmem:[%s200 + $0x168] sm:$0xff]
          %v1068 = vld [vmem:[%s200 + $0x170] sm:$0xff]
          %v1069 = vld [vmem:[%s200 + $0x178] sm:$0xff]
          %v1070 = vld [vmem:[%s200 + $0x180] sm:$0xff]
          %v1071 = vld [vmem:[%s200 + $0x188] sm:$0xff]
          %v1072 = vld [vmem:[%s200 + $0x190] sm:$0xff]
          %v1073 = vld [vmem:[%s200 + $0x198] sm:$0xff]
          %v1074 = vld [vmem:[%s200 + $0x1a0] sm:$0xff]
          %v1075 = vld [vmem:[%s200 + $0x1a8] sm:$0xff]
          %v1076 = vld [vmem:[%s200 + $0x1b0] sm:$0xff]
          %v1077 = vld [vmem:[%s200 + $0x1b8] sm:$0xff]
          %v1078 = vld [vmem:[%s200 + $0x1c0] sm:$0xff]
          %v1079 = vld [vmem:[%s200 + $0x1c8] sm:$0xff]
          %v1080 = vld [vmem:[%s200 + $0x1d0] sm:$0xff]
          %v1081 = vld [vmem:[%s200 + $0x1d8] sm:$0xff]
          %v1082 = vld [vmem:[%s200 + $0x1e0] sm:$0xff]
          %v1083 = vld [vmem:[%s200 + $0x1e8] sm:$0xff]
          %v1084 = vld [vmem:[%s200 + $0x1f0] sm:$0xff]
          %v1085 = vld [vmem:[%s200 + $0x1f8] sm:$0xff]
          %v1086 = vld [vmem:[%s200 + $0x200] sm:$0xff]
          %v1087 = vld [vmem:[%s200 + $0x208] sm:$0xff]
          %v1088 = vld [vmem:[%s200 + $0x210] sm:$0xff]
          %v1089 = vld [vmem:[%s200 + $0x218] sm:$0xff]
          %v1090 = vld [vmem:[%s200 + $0x220] sm:$0xff]
          %v1091 = vld [vmem:[%s200 + $0x228] sm:$0xff]
          %v1092 = vld [vmem:[%s200 + $0x230] sm:$0xff]
          %v1093 = vld [vmem:[%s200 + $0x238] sm:$0xff]
          %v1094 = vadd.f32 %v1022, %v515
          %v1095 = vadd.f32 %v1023, %v693
          %v1096 = vadd.f32 %v1024, %v871
          %v1097 = vadd.f32 %v1025, %v518
          %v1098 = vadd.f32 %v1026, %v696
          %v1099 = vadd.f32 %v1027, %v874
          %v1100 = vadd.f32 %v1028, %v521
          %v1101 = vadd.f32 %v1029, %v699
          %v1102 = vadd.f32 %v1030, %v877
          %v1103 = vadd.f32 %v1031, %v524
          %v1104 = vadd.f32 %v1032, %v702
          %v1105 = vadd.f32 %v1033, %v880
          %v1106 = vadd.f32 %v1034, %v527
          %v1107 = vadd.f32 %v1035, %v705
          %v1108 = vadd.f32 %v1036, %v883
          %v1109 = vadd.f32 %v1037, %v530
          %v1110 = vadd.f32 %v1038, %v708
          %v1111 = vadd.f32 %v1039, %v886
          %v1112 = vadd.f32 %v1040, %v533
          %v1113 = vadd.f32 %v1041, %v711
          %v1114 = vadd.f32 %v1042, %v889
          %v1115 = vadd.f32 %v1043, %v536
          %v1116 = vadd.f32 %v1044, %v714
          %v1117 = vadd.f32 %v1045, %v892
          %v1118 = vadd.f32 %v1046, %v539
          %v1119 = vadd.f32 %v1047, %v717
          %v1120 = vadd.f32 %v1048, %v895
          %v1121 = vadd.f32 %v1049, %v542
          %v1122 = vadd.f32 %v1050, %v720
          %v1123 = vadd.f32 %v1051, %v898
          %v1124 = vadd.f32 %v1052, %v545
          %v1125 = vadd.f32 %v1053, %v723
          %v1126 = vadd.f32 %v1054, %v901
          %v1127 = vadd.f32 %v1055, %v548
          %v1128 = vadd.f32 %v1056, %v726
          %v1129 = vadd.f32 %v1057, %v904
          %v1130 = vadd.f32 %v1058, %v551
          %v1131 = vadd.f32 %v1059, %v729
          %v1132 = vadd.f32 %v1060, %v907
          %v1133 = vadd.f32 %v1061, %v554
          %v1134 = vadd.f32 %v1062, %v732
          %v1135 = vadd.f32 %v1063, %v910
          %v1136 = vadd.f32 %v1064, %v557
          %v1137 = vadd.f32 %v1065, %v735
          %v1138 = vadd.f32 %v1066, %v913
          %v1139 = vadd.f32 %v1067, %v560
          %v1140 = vadd.f32 %v1068, %v738
          %v1141 = vadd.f32 %v1069, %v916
          %v1142 = vadd.f32 %v1070, %v563
          %v1143 = vadd.f32 %v1071, %v741
          %v1144 = vadd.f32 %v1072, %v919
          %v1145 = vadd.f32 %v1073, %v566
          %v1146 = vadd.f32 %v1074, %v744
          %v1147 = vadd.f32 %v1075, %v922
          %v1148 = vadd.f32 %v1076, %v569
          %v1149 = vadd.f32 %v1077, %v747
          %v1150 = vadd.f32 %v1078, %v925
          %v1151 = vadd.f32 %v1079, %v572
          %v1152 = vadd.f32 %v1080, %v750
          %v1153 = vadd.f32 %v1081, %v928
          %v1154 = vadd.f32 %v1082, %v575
          %v1155 = vadd.f32 %v1083, %v753
          %v1156 = vadd.f32 %v1084, %v931
          %v1157 = vadd.f32 %v1085, %v578
          %v1158 = vadd.f32 %v1086, %v756
          %v1159 = vadd.f32 %v1087, %v934
          %v1160 = vadd.f32 %v1088, %v581
          %v1161 = vadd.f32 %v1089, %v759
          %v1162 = vadd.f32 %v1090, %v937
          %v1163 = vadd.f32 %v1091, %v584
          %v1164 = vadd.f32 %v1092, %v762
          %v1165 = vadd.f32 %v1093, %v940
          %1166 = vst [vmem:[%s200] sm:$0xff] %v1094
          %1167 = vst [vmem:[%s200 + $0x8] sm:$0xff] %v1095
          %1168 = vst [vmem:[%s200 + $0x10] sm:$0xff] %v1096
          %1169 = vst [vmem:[%s200 + $0x18] sm:$0xff] %v1097
          %1170 = vst [vmem:[%s200 + $0x20] sm:$0xff] %v1098
          %1171 = vst [vmem:[%s200 + $0x28] sm:$0xff] %v1099
          %1172 = vst [vmem:[%s200 + $0x30] sm:$0xff] %v1100
          %1173 = vst [vmem:[%s200 + $0x38] sm:$0xff] %v1101
          %1174 = vst [vmem:[%s200 + $0x40] sm:$0xff] %v1102
          %1175 = vst [vmem:[%s200 + $0x48] sm:$0xff] %v1103
          %1176 = vst [vmem:[%s200 + $0x50] sm:$0xff] %v1104
          %1177 = vst [vmem:[%s200 + $0x58] sm:$0xff] %v1105
          %1178 = vst [vmem:[%s200 + $0x60] sm:$0xff] %v1106
          %1179 = vst [vmem:[%s200 + $0x68] sm:$0xff] %v1107
          %1180 = vst [vmem:[%s200 + $0x70] sm:$0xff] %v1108
          %1181 = vst [vmem:[%s200 + $0x78] sm:$0xff] %v1109
          %1182 = vst [vmem:[%s200 + $0x80] sm:$0xff] %v1110
          %1183 = vst [vmem:[%s200 + $0x88] sm:$0xff] %v1111
          %1184 = vst [vmem:[%s200 + $0x90] sm:$0xff] %v1112
          %1185 = vst [vmem:[%s200 + $0x98] sm:$0xff] %v1113
          %1186 = vst [vmem:[%s200 + $0xa0] sm:$0xff] %v1114
          %1187 = vst [vmem:[%s200 + $0xa8] sm:$0xff] %v1115
          %1188 = vst [vmem:[%s200 + $0xb0] sm:$0xff] %v1116
          %1189 = vst [vmem:[%s200 + $0xb8] sm:$0xff] %v1117
          %1190 = vst [vmem:[%s200 + $0xc0] sm:$0xff] %v1118
          %1191 = vst [vmem:[%s200 + $0xc8] sm:$0xff] %v1119
          %1192 = vst [vmem:[%s200 + $0xd0] sm:$0xff] %v1120
          %1193 = vst [vmem:[%s200 + $0xd8] sm:$0xff] %v1121
          %1194 = vst [vmem:[%s200 + $0xe0] sm:$0xff] %v1122
          %1195 = vst [vmem:[%s200 + $0xe8] sm:$0xff] %v1123
          %1196 = vst [vmem:[%s200 + $0xf0] sm:$0xff] %v1124
          %1197 = vst [vmem:[%s200 + $0xf8] sm:$0xff] %v1125
          %1198 = vst [vmem:[%s200 + $0x100] sm:$0xff] %v1126
          %1199 = vst [vmem:[%s200 + $0x108] sm:$0xff] %v1127
          %1200 = vst [vmem:[%s200 + $0x110] sm:$0xff] %v1128
          %1201 = vst [vmem:[%s200 + $0x118] sm:$0xff] %v1129
          %1202 = vst [vmem:[%s200 + $0x120] sm:$0xff] %v1130
          %1203 = vst [vmem:[%s200 + $0x128] sm:$0xff] %v1131
          %1204 = vst [vmem:[%s200 + $0x130] sm:$0xff] %v1132
          %1205 = vst [vmem:[%s200 + $0x138] sm:$0xff] %v1133
          %1206 = vst [vmem:[%s200 + $0x140] sm:$0xff] %v1134
          %1207 = vst [vmem:[%s200 + $0x148] sm:$0xff] %v1135
          %1208 = vst [vmem:[%s200 + $0x150] sm:$0xff] %v1136
          %1209 = vst [vmem:[%s200 + $0x158] sm:$0xff] %v1137
          %1210 = vst [vmem:[%s200 + $0x160] sm:$0xff] %v1138
          %1211 = vst [vmem:[%s200 + $0x168] sm:$0xff] %v1139
          %1212 = vst [vmem:[%s200 + $0x170] sm:$0xff] %v1140
          %1213 = vst [vmem:[%s200 + $0x178] sm:$0xff] %v1141
          %1214 = vst [vmem:[%s200 + $0x180] sm:$0xff] %v1142
          %1215 = vst [vmem:[%s200 + $0x188] sm:$0xff] %v1143
          %1216 = vst [vmem:[%s200 + $0x190] sm:$0xff] %v1144
          %1217 = vst [vmem:[%s200 + $0x198] sm:$0xff] %v1145
          %1218 = vst [vmem:[%s200 + $0x1a0] sm:$0xff] %v1146
          %1219 = vst [vmem:[%s200 + $0x1a8] sm:$0xff] %v1147
          %1220 = vst [vmem:[%s200 + $0x1b0] sm:$0xff] %v1148
          %1221 = vst [vmem:[%s200 + $0x1b8] sm:$0xff] %v1149
          %1222 = vst [vmem:[%s200 + $0x1c0] sm:$0xff] %v1150
          %1223 = vst [vmem:[%s200 + $0x1c8] sm:$0xff] %v1151
          %1224 = vst [vmem:[%s200 + $0x1d0] sm:$0xff] %v1152
          %1225 = vst [vmem:[%s200 + $0x1d8] sm:$0xff] %v1153
          %1226 = vst [vmem:[%s200 + $0x1e0] sm:$0xff] %v1154
          %1227 = vst [vmem:[%s200 + $0x1e8] sm:$0xff] %v1155
          %1228 = vst [vmem:[%s200 + $0x1f0] sm:$0xff] %v1156
          %1229 = vst [vmem:[%s200 + $0x1f8] sm:$0xff] %v1157
          %1230 = vst [vmem:[%s200 + $0x200] sm:$0xff] %v1158
          %1231 = vst [vmem:[%s200 + $0x208] sm:$0xff] %v1159
          %1232 = vst [vmem:[%s200 + $0x210] sm:$0xff] %v1160
          %1233 = vst [vmem:[%s200 + $0x218] sm:$0xff] %v1161
          %1234 = vst [vmem:[%s200 + $0x220] sm:$0xff] %v1162
          %1235 = vst [vmem:[%s200 + $0x228] sm:$0xff] %v1163
          %1236 = vst [vmem:[%s200 + $0x230] sm:$0xff] %v1164
          %1237 = vst [vmem:[%s200 + $0x238] sm:$0xff] %v1165
        $region36: #{tpu_custom_call.1} parent=27 // pred_fallthru
          _
        %s1238 = sand.u32 %s101, 1
        %s1239 = scalar_lea.sflag [#allocation3], %s1238
        %s1240 = sand.u32 %s101, 1
        %s1241 = smul.addr %s1240, 576
        %s1242 = scalar_lea.vmem [#allocation2], %s1241
        // Predicated region
        $region37: #{tpu_custom_call.1} parent=27 // pred_check
          %p1243 = pneg %p111
        $region38: #{tpu_custom_call.1} parent=27 // pred_check_branch
          %1245 = sbr.rel (%p1243) target = $region40
        $region39: #{tpu_custom_call.1} parent=27 // pred_region
          %s1246 = smul.u32 24, %s21
          %s1247 = smul.u32 3, %s22
          %1249 = vsyncadd %s1239, 0
          %s1250 = smul.addr %s1246, 3
          %s1251 = sadd.s32 %s1247, %s1250
          %s1252 = smul.addr %s1251, 8
          %s1253 = scalar_lea.hbm %s2, %s1252
          %s1254 = sshll.u32 %s1242, 4
          %s1255 = int_to_ptr.vmem [resolvable:$true] %s1254
          %s1256 = sshll.u32 %s1253, 4
          %s1257 = int_to_ptr.hbm [resolvable:$true] %s1256
          %1262 = dma.vmem_to_hbm [thread:$0]  %s1255, 9216, %s1257, %s1239, 384, 384, 24
        $region40: #{tpu_custom_call.1} parent=27 // pred_fallthru
          _
      $region28: #{tpu_custom_call.1} parent=5 // pred_fallthru
        _
      %p1263 = scmp.le.s32.totalorder 2, %s11
      // Predicated region
      $region41: #{tpu_custom_call.1} parent=5 // pred_check
        %p1264 = pneg %p1263
      $region42: #{tpu_custom_call.1} parent=5 // pred_check_branch
        %1266 = sbr.rel (%p1264) target = $region44
      $region43: #{tpu_custom_call.1} parent=5 // pred_region
        %s1267 = ssub.s32 %s11, 2
        // Predicated region
        $region45: #{tpu_custom_call.1} parent=43 // pred_check
          %p1268 = pneg %p117
        $region46: #{tpu_custom_call.1} parent=43 // pred_check_branch
          %1270 = sbr.rel (%p1268) target = $region48
        $region47: #{tpu_custom_call.1} parent=43 // pred_region
          %s1271 = sand.u32 %s102, 1
          %s1272 = scalar_lea.sflag [#allocation3], %s1271
          %s1273 = sand.u32 %s102, 1
          %s1274 = smul.addr %s1273, 576
          %s1275 = scalar_lea.vmem [#allocation2], %s1274
          %1277 = dma.done %s1272, 9216
        $region48: #{tpu_custom_call.1} parent=43 // pred_fallthru
          _
      $region44: #{tpu_custom_call.1} parent=5 // pred_fallthru
        _
    $region6: #{tpu_custom_call.1} parent=1 // loop_footer
      %s15 = sadd.s32 1, %s11
    $region7: #{tpu_custom_call.1} parent=1 // loop_footer_branch
      %10 = sbr.rel target = $region3
    $region8: #{tpu_custom_call.1} parent=1 // loop_exit
      _
    %1278 = vsyncpa [#allocation3], 1
    %s1279 = scalar_lea.sflag [#allocation3], 1
    %1280 = vsyncpa %s1279, 1

</llo_original>
